<compile_context>
chip_gen: v7x
topology: tpu7x:2x2x1
jax: 0.10.0
libtpu: 0.0.40
codegen_flags: <defaults>
</compile_context>

<pallas_src>
import jax
import jax.numpy as jnp
from jax.experimental import pallas as pl
from jax.experimental.pallas import tpu as pltpu


def _channel_attention_kernel(x_ref, w1t_ref, w2t_ref, o_ref):
    """One batch tile of ChannelAttention.

    x_ref   : (B, C, H*W) VMEM  input activations (native dtype)
    w1t_ref : (C, R)      VMEM  transposed squeeze weight (Conv2d C->R, 1x1)
    w2t_ref : (R, C)      VMEM  transposed excite weight  (Conv2d R->C, 1x1)
    o_ref   : (B, C)      VMEM  sigmoid channel-attention weights
    """
    x = x_ref[...]                                    # single full-tile load
    b = x.shape[0]
    inv_hw = jnp.float32(1.0 / x.shape[-1])

    # Global pools: lane-axis reductions over the one loaded tile.
    #  - sum widens to f32 only inside the reduction
    #  - max stays in the native dtype (exact); only the (B, C) result is cast
    avg_p = jnp.sum(x, axis=-1, dtype=jnp.float32) * inv_hw        # (B, C) f32
    max_p = jnp.max(x, axis=-1).astype(jnp.float32)                # (B, C) f32

    w1t = w1t_ref[...].astype(jnp.float32)                         # (C, R)
    w2t = w2t_ref[...].astype(jnp.float32)                         # (R, C)

    # Shared MLP fused across both pooled branches (linearity of 2nd conv):
    #   MLP(avg) + MLP(max) = (relu(avg@W1t) + relu(max@W1t)) @ W2t
    # Stack both branches so the first layer is a single MXU push.
    pooled = jnp.concatenate([avg_p, max_p], axis=0)               # (2B, C)
    h = jnp.maximum(
        jnp.dot(pooled, w1t, preferred_element_type=jnp.float32), 0.0)  # (2B, R)
    h = h[:b] + h[b:]                                              # (B, R)
    mlp_sum = jnp.dot(h, w2t, preferred_element_type=jnp.float32)  # (B, C)

    o_ref[...] = jax.nn.sigmoid(mlp_sum).astype(o_ref.dtype)


def _tpu_info():
    """(vmem_capacity_bytes, tensorcores_per_chip) with conservative fallbacks."""
    capacity = 64 << 20          # conservative default (v7x per-TC VMEM)
    cores = 1
    try:
        info = pltpu.get_tpu_info()
        capacity = int(getattr(info, "vmem_capacity_bytes", capacity))
        for attr in ("tensor_cores_per_chip", "num_cores", "cores_per_chip"):
            v = getattr(info, attr, None)
            if v:
                cores = int(v)
                break
    except Exception:
        return capacity, cores
    # v7x heuristic: 64 MiB/TC VMEM implies 2 TensorCores per chip.
    if cores == 1 and capacity <= (64 << 20):
        cores = 2
    return capacity, cores


def _default_vmem_limit(capacity):
    # 128 MiB parts (v5e/v6e): raise the scoped limit to ~96 MiB for big slabs.
    # 64 MiB parts (v7x): keep <= ~44 MiB so double-buffers + output + weights
    # + Mosaic internal scratch still fit per TensorCore.
    if capacity >= (100 << 20):
        return 96 << 20
    return min(44 << 20, max(16 << 20, capacity - (20 << 20)))


def _round_up(x, m):
    return ((x + m - 1) // m) * m


def _choose_batch_block(n, bytes_per_batch_elem, vmem_limit_bytes, num_cores):
    """Pick the batch tile B.

    Invariants:
      * B is a multiple of 8 OR equal to n, so the (B, C) output block is never
        sublane-misaligned (partial last grid blocks are handled by Pallas'
        masked stores; every batch row is independent, so padded rows never
        contaminate real outputs).
      * The double-buffered input block (2 * B * bytes_per_batch_elem) targets
        ~2/3 of the VMEM limit (rest: output, weights, Mosaic scratch).
      * Multi-TensorCore parts (v7x): prefer >= 2 balanced grid steps so the
        'parallel' grid axis feeds both cores.  Single-TC parts: one big slab
        minimizes per-step overhead (~0.35 us/step).
    """
    if n <= 8:
        return n
    budget = (2 * vmem_limit_bytes) // 3
    cap = budget // (2 * bytes_per_batch_elem)
    cap = max(8, (cap // 8) * 8)                 # at least one aligned tile
    if num_cores > 1:
        target = _round_up(pl.cdiv(n, 2), 8)     # ~2 even steps
        b = min(cap, target)
    else:
        b = n if n <= cap else cap
    if b >= n:
        return n
    return max(8, (b // 8) * 8)


def channel_attention_forward(x, w1, w2, *, vmem_limit_bytes=None):
    """x: (N, C, H, W); w1: (R, C) squeeze weight; w2: (C, R) excite weight.
    Returns the (N, C, 1, 1) sigmoid channel-attention map (dtype of x)."""
    N, C, H, W = x.shape
    R = w1.shape[0]
    HW = H * W

    capacity, num_cores = _tpu_info()
    if vmem_limit_bytes is None:
        vmem_limit_bytes = _default_vmem_limit(capacity)

    # Lane-dense view of the activations; free for a contiguous NCHW tensor
    # (a non-contiguous / channels-last input would silently copy in HBM).
    x_flat = x.reshape(N, C, HW)

    # Pre-transpose the tiny weights once so the kernel matmuls are plain
    # (2B, C) @ (C, R) and (B, R) @ (R, C).
    w1t = jnp.asarray(w1).T                              # (C, R)
    w2t = jnp.asarray(w2).T                              # (R, C)

    bytes_per_batch = C * HW * x.dtype.itemsize
    B = _choose_batch_block(N, bytes_per_batch, vmem_limit_bytes, num_cores)
    grid_steps = pl.cdiv(N, B)

    # If the minimum aligned tile overshoots the requested budget (huge C*H*W),
    # raise the scoped limit just enough, never above physical capacity.
    needed = 2 * B * bytes_per_batch + (8 << 20)
    vmem_limit_bytes = int(min(max(vmem_limit_bytes, needed), capacity))

    cost = pl.CostEstimate(
        flops=int(2 * N * C * HW                 # avg + max reductions
                  + 2 * (2 * N) * C * R          # first (stacked) matmul
                  + 2 * N * R * C),              # second matmul
        transcendentals=int(N * C),              # sigmoid
        bytes_accessed=int(N * C * HW * x.dtype.itemsize
                           + 2 * C * R * w1t.dtype.itemsize
                           + N * C * x.dtype.itemsize),
    )

    grid_spec = pltpu.PrefetchScalarGridSpec(
        num_scalar_prefetch=0,
        grid=(grid_steps,),
        in_specs=[
            pl.BlockSpec((B, C, HW), lambda n: (n, 0, 0)),
            pl.BlockSpec((C, R), lambda n: (0, 0)),
            pl.BlockSpec((R, C), lambda n: (0, 0)),
        ],
        out_specs=pl.BlockSpec((B, C), lambda n: (n, 0)),
    )

    out = pl.pallas_call(
        _channel_attention_kernel,
        out_shape=jax.ShapeDtypeStruct((N, C), x.dtype),
        grid_spec=grid_spec,
        compiler_params=pltpu.CompilerParams(
            dimension_semantics=("parallel",),
            vmem_limit_bytes=vmem_limit_bytes,
        ),
        cost_estimate=cost,
    )(x_flat, w1t, w2t)

    return out.reshape(N, C, 1, 1)


def channel_attention_reference(x, w1, w2):
    """Pure-JAX reference mirroring the PyTorch ChannelAttention module."""
    avg = jnp.mean(x, axis=(2, 3))                      # (N, C)
    mx = jnp.max(x, axis=(2, 3))                        # (N, C)

    def mlp(v):
        h = jnp.maximum(v @ w1.T, 0.0)                  # (N, R)
        return h @ w2.T                                 # (N, C)

    ca = jax.nn.sigmoid(mlp(avg) + mlp(mx))
    return ca[:, :, None, None]                         # (N, C, 1, 1)


if __name__ == "__main__":
    N, C, H, W = 2, 4, 16, 16
    ratio = 16
    R = max(1, C // ratio)

    key = jax.random.PRNGKey(0)
    kx, k1, k2 = jax.random.split(key, 3)
    x = jax.random.normal(kx, (N, C, H, W), dtype=jnp.float32)
    w1 = 0.5 * jax.random.normal(k1, (R, C), dtype=jnp.float32)   # Conv2d(C->R, 1x1)
    w2 = 0.5 * jax.random.normal(k2, (C, R), dtype=jnp.float32)   # Conv2d(R->C, 1x1)

    out = channel_attention_forward(x, w1, w2)
    out = jax.block_until_ready(out)

    ref = channel_attention_reference(x, w1, w2)
    assert out.shape == (N, C, 1, 1)
    max_err = jnp.max(jnp.abs(out - ref))
    assert jnp.allclose(out, ref, atol=1e-5, rtol=1e-5), f"max abs err {max_err}"

    print("KERNEL_OK")
</pallas_src>

<mosaic_0001>
module attributes {stable_mosaic.version = 11 : i64} {
  func.func @_channel_attention_kernel(%arg0: i32, %arg1: memref<2x4x256xf32, #tpu.memory_space<vmem>>, %arg2: memref<4x1xf32, #tpu.memory_space<vmem>>, %arg3: memref<1x4xf32, #tpu.memory_space<vmem>>, %arg4: memref<2x4xf32, #tpu.memory_space<vmem>>) attributes {dimension_semantics = [#tpu.dimension_semantics<parallel>], iteration_bounds = array<i64: 1>, scalar_prefetch = 0 : i64, scratch_operands = 0 : i64, tpu.core_type = #tpu.core_type<tc>, window_params = [{transform_indices = @transform_0, window_bounds = array<i64: 2, 4, 256>}, {pipeline_mode = #tpu.pipeline_mode<synchronous>, transform_indices = @transform_1, window_bounds = array<i64: 4, 1>}, {pipeline_mode = #tpu.pipeline_mode<synchronous>, transform_indices = @transform_2, window_bounds = array<i64: 1, 4>}, {transform_indices = @transform_3, window_bounds = array<i64: 2, 4>}]} {
    %c0 = arith.constant 0 : index
    %c0_0 = arith.constant 0 : index
    %c0_1 = arith.constant 0 : index
    %0 = vector.load %arg1[%c0, %c0_0, %c0_1] : memref<2x4x256xf32, #tpu.memory_space<vmem>>, vector<2x4x256xf32>
    %cst = arith.constant dense<0.000000e+00> : vector<2x4xf32>
    %1 = vector.multi_reduction <add>, %0, %cst [2] : vector<2x4x256xf32> to vector<2x4xf32>
    %cst_2 = arith.constant 3.906250e-03 : f32
    %2 = vector.broadcast %cst_2 : f32 to vector<2x4xf32>
    %3 = arith.mulf %1, %2 : vector<2x4xf32>
    %cst_3 = arith.constant dense<0xFF800000> : vector<2x4xf32>
    %4 = vector.multi_reduction <maximumf>, %0, %cst_3 [2] : vector<2x4x256xf32> to vector<2x4xf32>
    %c0_4 = arith.constant 0 : index
    %c0_5 = arith.constant 0 : index
    %5 = vector.load %arg2[%c0_4, %c0_5] : memref<4x1xf32, #tpu.memory_space<vmem>>, vector<4x1xf32>
    %c0_6 = arith.constant 0 : index
    %c0_7 = arith.constant 0 : index
    %6 = vector.load %arg3[%c0_6, %c0_7] : memref<1x4xf32, #tpu.memory_space<vmem>>, vector<1x4xf32>
    %7 = tpu.concatenate %3, %4 in 0 : vector<2x4xf32>, vector<2x4xf32> -> vector<4x4xf32>
    %cst_8 = arith.constant dense<0.000000e+00> : vector<4x1xf32>
    %8 = tpu.matmul %7, %5, %cst_8 {dimension_numbers = #tpu.dot_dimension_numbers<[1], [0], [0], [1], [0, 0, 1, 1], [], []>} : vector<4x4xf32>, vector<4x1xf32>, vector<4x1xf32> -> vector<4x1xf32>
    %cst_9 = arith.constant 0.000000e+00 : f32
    %9 = vector.broadcast %cst_9 : f32 to vector<4x1xf32>
    %10 = arith.maximumf %8, %9 : vector<4x1xf32>
    %11 = vector.extract_strided_slice %10 {offsets = [0, 0], sizes = [2, 1], strides = [1, 1]} : vector<4x1xf32> to vector<2x1xf32>
    %12 = vector.extract_strided_slice %10 {offsets = [2, 0], sizes = [2, 1], strides = [1, 1]} : vector<4x1xf32> to vector<2x1xf32>
    %13 = arith.addf %11, %12 : vector<2x1xf32>
    %cst_10 = arith.constant dense<0.000000e+00> : vector<2x4xf32>
    %14 = tpu.matmul %13, %6, %cst_10 {dimension_numbers = #tpu.dot_dimension_numbers<[1], [0], [0], [1], [0, 0, 1, 1], [], []>} : vector<2x1xf32>, vector<1x4xf32>, vector<2x4xf32> -> vector<2x4xf32>
    %15 = arith.negf %14 : vector<2x4xf32>
    %16 = math.exp %15 : vector<2x4xf32>
    %cst_11 = arith.constant 1.000000e+00 : f32
    %17 = vector.broadcast %cst_11 : f32 to vector<2x4xf32>
    %18 = arith.addf %17, %16 : vector<2x4xf32>
    %19 = arith.divf %17, %18 : vector<2x4xf32>
    %c0_12 = arith.constant 0 : index
    %c0_13 = arith.constant 0 : index
    %20 = vector.load %arg4[%c0_12, %c0_13] : memref<2x4xf32, #tpu.memory_space<vmem>>, vector<2x4xf32>
    tpu.vector_store %arg4[%c0_12, %c0_13], %19 {strides = array<i32>} : memref<2x4xf32, #tpu.memory_space<vmem>>, vector<2x4xf32>,
    return
  }
  func.func @transform_0(%arg0: i32) -> (i32, i32, i32) {
    %c0_i32 = arith.constant 0 : i32
    %c0_i32_0 = arith.constant 0 : i32
    %c0_i32_1 = arith.constant 0 : i32
    return %arg0, %c0_i32, %c0_i32_0 : i32, i32, i32
  }
  func.func @transform_1(%arg0: i32) -> (i32, i32) {
    %c0_i32 = arith.constant 0 : i32
    %c0_i32_0 = arith.constant 0 : i32
    %c0_i32_1 = arith.constant 0 : i32
    return %c0_i32, %c0_i32_0 : i32, i32
  }
  func.func @transform_2(%arg0: i32) -> (i32, i32) {
    %c0_i32 = arith.constant 0 : i32
    %c0_i32_0 = arith.constant 0 : i32
    %c0_i32_1 = arith.constant 0 : i32
    return %c0_i32, %c0_i32_0 : i32, i32
  }
  func.func @transform_3(%arg0: i32) -> (i32, i32) {
    %c0_i32 = arith.constant 0 : i32
    %c0_i32_0 = arith.constant 0 : i32
    return %arg0, %c0_i32 : i32, i32
  }
}

</mosaic_0001>

<llo_original>
// kernel: tpu_custom_call.1
$region0: #{tpu_custom_call.1}
  #allocation0 [shape = 'u32[]', space=smem, size = 0x4, offset = 0x4, fixed_abs, tag = 'smem constant byte address 0x4 - core index']
  #allocation1 [shape = 'u32[144,128]{1,0:T(1,128)}', space=vmem, size = 0x12000, scoped, tag = 'internal scratch']
  %s0 = inlined_call_operand.hbm [shape: f32[2,4,256], index: 0, kind: input, shape index: {}]
  %s1 = inlined_call_operand.vmem [shape: f32[4,1], index: 1, kind: input, shape index: {}]
  %s2 = inlined_call_operand.vmem [shape: f32[1,4], index: 2, kind: input, shape index: {}]
  %s3 = inlined_call_operand.hbm [shape: f32[2,4], index: 3, kind: output, shape index: {}]
  %s4 = sld [smem:[#allocation0]]
  $region26: #{tpu_custom_call.1} parent=0
    _
  %s6 = ssub.s32 1, %s4
  %s7 = scalar_select 0, %s6, %s4
  $region1: #{tpu_custom_call.1} parent=0
    #allocation2 [shape = 'u8[8192]{0}', space=vmem, size = 0x2000, scoped, tag = 'input window, operand 0, single buffered']
    #allocation3 [shape = 's32[1]{0}', space=sflag, size = 0x4, scoped, tag = 'scoped memory for tpu_custom_call.1']
    #allocation4 [shape = 's32[1]{0}', space=sflag, size = 0x4, scoped, tag = 'scoped memory for tpu_custom_call.1']
    #allocation5 [shape = 'u8[1024]{0}', space=vmem, size = 0x400, scoped, tag = 'output window, operand 0, single buffered']
    %8 = vsyncpa [#allocation3], 0
    %9 = vsyncpa [#allocation4], 0
    // Predicated region
    $region2: #{tpu_custom_call.1} parent=1 // pred_check
      _
    $region3: #{tpu_custom_call.1} parent=1 // pred_check_branch
      %11 = sbr.rel (0) target = $region5
    $region4: #{tpu_custom_call.1} parent=1 // pred_region
      %s13 = ssub.s32 256, 256
      %14 = vsyncadd [#allocation3], %s13
      %s15 = sshll.u32 [#allocation2], 4
      %s16 = int_to_ptr.vmem [resolvable:$true] %s15
      %21 = dma.hbm_to_vmem [thread:$0]  %s0, 256, %s16, [#allocation3], 128, 128, 8
    $region5: #{tpu_custom_call.1} parent=1 // pred_fallthru
      _
    // Predicated region
    $region6: #{tpu_custom_call.1} parent=1 // pred_check
      _
    $region7: #{tpu_custom_call.1} parent=1 // pred_check_branch
      %23 = sbr.rel (0) target = $region9
    $region8: #{tpu_custom_call.1} parent=1 // pred_region
      _
    $region9: #{tpu_custom_call.1} parent=1 // pred_fallthru
      _
    // Predicated region
    $region10: #{tpu_custom_call.1} parent=1 // pred_check
      _
    $region11: #{tpu_custom_call.1} parent=1 // pred_check_branch
      %25 = sbr.rel (0) target = $region13
    $region12: #{tpu_custom_call.1} parent=1 // pred_region
      _
    $region13: #{tpu_custom_call.1} parent=1 // pred_fallthru
      _
    // Predicated region
    $region14: #{tpu_custom_call.1} parent=1 // pred_check
      _
    $region15: #{tpu_custom_call.1} parent=1 // pred_check_branch
      %27 = sbr.rel (0) target = $region17
    $region16: #{tpu_custom_call.1} parent=1 // pred_region
      %28 = dma.done [#allocation3], 256
    $region17: #{tpu_custom_call.1} parent=1 // pred_fallthru
      _
    %v29 = vld [vmem:[#allocation2] sm:$0xff]
    %v30 = vld [vmem:[#allocation2 + $0x8] sm:$0xff]
    %v33 = vcombine.high %v29, %v29
    %v34 = vcombine.high %v30, %v30
    %vm37 = vcmask 1043456
    %v38 = vsel %vm37, %v29, 0.0
    %v39 = vsel %vm37, %v33, 0.0
    %v40 = vadd.f32 %v38, %v39
    %41 = vadd.xlane.f32.xlu0 %v40
    %v42 = vpop.xlane.xlu0 %41
    %v43 = vsel %vm37, %v30, 0.0
    %v44 = vsel %vm37, %v34, 0.0
    %v45 = vadd.f32 %v43, %v44
    %46 = vadd.xlane.f32.xlu0 %v45
    %v47 = vpop.xlane.xlu0 %46
    %v48 = vmul.f32 %v42, 0.00390625
    %v49 = vmul.f32 %v47, 0.00390625
    %v50 = vsel %vm37, %v29, -inf
    %v51 = vsel %vm37, %v33, -inf
    %v52 = vmax.f32 %v50, %v51
    %53 = vmax.xlane.f32.xlu0 %v52
    %v54 = vpop.xlane.xlu0 %53
    %v55 = vsel %vm37, %v30, -inf
    %v56 = vsel %vm37, %v34, -inf
    %v57 = vmax.f32 %v55, %v56
    %58 = vmax.xlane.f32.xlu0 %v57
    %v59 = vpop.xlane.xlu0 %58
    %v60 = vld [vmem:[%s1] sm:$0xf]
    %v61 = vld [vmem:[%s2] sm:$0x1]
    %v64 = vlaneseq
    %v65 = vand.u32 %v64, 127
    %v66 = vlaneseq
    %v67 = vshrl.u32 %v66, 7
    %v68 = vsub.s32 %v65, %v67
    %v69 = vrot.slane %v48, %v68
    %v70 = vlaneseq
    %v71 = vshrl.u32 %v70, 7
    %v72 = vsub.s32 %v65, %v71
    %v73 = vrot.slane %v49, %v72
    %vm74 = vcmask 1041409
    %v75 = vsel %vm74, %v73, %v69
    %v79 = vlaneseq
    %v80 = vshrl.u32 %v79, 7
    %v81 = vsub.s32 %v65, %v80
    %v82 = vrot.slane %v54, %v81
    %v83 = vlaneseq
    %v84 = vshrl.u32 %v83, 7
    %v85 = vsub.s32 %v65, %v84
    %v86 = vrot.slane %v59, %v85
    %vm87 = vcmask 1043459
    %v88 = vsel %vm87, %v86, %v82
    %vm90 = vcmask 1041408
    %v91 = vsel %vm90, %v75, %v88
    %vm92 = vcmask 31744
    %v94 = vsel %vm92, %v91, 0
    %v97 = vsel %vm37, %v60, 0
    %99 = vmatprep.subr.mxu0 0.0
    %100 = vmatpush1.msra.mxu0 %v97
    %101 = vmatprep.subr.mxu0 0.0
    %102 = vmatpush1.msra.mxu0 0.0
    %103 = vmatprep.subr.mxu0 0.0
    %104 = vmatpush1.msra.mxu0 0.0
    %105 = vmatprep.subr.mxu0 0.0
    %106 = vmatpush1.msra.mxu0 0.0
    %107 = vmatprep.subr.mxu0 0.0
    %108 = vmatpush1.msra.mxu0 0.0
    %109 = vmatprep.subr.mxu0 0.0
    %110 = vmatpush1.msra.mxu0 0.0
    %111 = vmatprep.subr.mxu0 0.0
    %112 = vmatpush1.msra.mxu0 0.0
    %113 = vmatprep.subr.mxu0 0.0
    %114 = vmatpush1.msra.mxu0 0.0
    %115 = vmatprep.subr.mxu0 0.0
    %116 = vmatpush1.msra.mxu0 0.0
    %117 = vmatprep.subr.mxu0 0.0
    %118 = vmatpush1.msra.mxu0 0.0
    %119 = vmatprep.subr.mxu0 0.0
    %120 = vmatpush1.msra.mxu0 0.0
    %121 = vmatprep.subr.mxu0 0.0
    %122 = vmatpush1.msra.mxu0 0.0
    %123 = vmatprep.subr.mxu0 0.0
    %124 = vmatpush1.msra.mxu0 0.0
    %125 = vmatprep.subr.mxu0 0.0
    %126 = vmatpush1.msra.mxu0 0.0
    %127 = vmatprep.subr.mxu0 0.0
    %128 = vmatpush1.msra.mxu0 0.0
    %129 = vmatprep.subr.mxu0 0.0
    %130 = vmatpush1.msra.mxu0 0.0
    %131 = vmatprep.subr.mxu0 0.0
    %132 = vmatpush1.msra.mxu0 0.0
    %133 = vmatprep.subr.mxu0 0.0
    %134 = vmatpush1.msra.mxu0 0.0
    %135 = vmatprep.subr.mxu0 0.0
    %136 = vmatpush1.msra.mxu0 0.0
    %137 = vmatprep.subr.mxu0 0.0
    %138 = vmatpush1.msra.mxu0 0.0
    %139 = vmatprep.subr.mxu0 0.0
    %140 = vmatpush1.msra.mxu0 0.0
    %141 = vmatprep.subr.mxu0 0.0
    %142 = vmatpush1.msra.mxu0 0.0
    %143 = vmatprep.subr.mxu0 0.0
    %144 = vmatpush1.msra.mxu0 0.0
    %145 = vmatprep.subr.mxu0 0.0
    %146 = vmatpush1.msra.mxu0 0.0
    %147 = vmatprep.subr.mxu0 0.0
    %148 = vmatpush1.msra.mxu0 0.0
    %149 = vmatprep.subr.mxu0 0.0
    %150 = vmatpush1.msra.mxu0 0.0
    %151 = vmatprep.subr.mxu0 0.0
    %152 = vmatpush1.msra.mxu0 0.0
    %153 = vmatprep.subr.mxu0 0.0
    %154 = vmatpush1.msra.mxu0 0.0
    %155 = vmatprep.subr.mxu0 0.0
    %156 = vmatpush1.msra.mxu0 0.0
    %157 = vmatprep.subr.mxu0 0.0
    %158 = vmatpush1.msra.mxu0 0.0
    %159 = vmatprep.subr.mxu0 0.0
    %160 = vmatpush1.msra.mxu0 0.0
    %161 = vmatprep.subr.mxu0 0.0
    %162 = vmatpush1.msra.mxu0 0.0
    %163 = vmatprep.mubr.f32.mxu0 0.0
    %164 = vmatmul.mubr.f32.gmra.mrb[0].mxu0 %v94
    %v165 = vpop.f32.mrb[0].mxu0
    %v166 = vadd.f32 0.0, %v165
    %v167 = vpop.f32.mrb[0].mxu0
    %168 = vdwg.mxu0
    %v169 = vmax.f32 %v166, 0.0
    %v171 = vrot.slane %v169, 2
    %v173 = vadd.f32 %v169, %v171
    %vm174 = vcmask 7168
    %v176 = vsel %vm174, %v173, 0
    %vm178 = vcmask 1040384
    %v180 = vsel %vm178, %v61, 0
    %182 = vmatprep.subr.mxu0 0.0
    %183 = vmatpush1.msra.mxu0 %v180
    %184 = vmatprep.subr.mxu0 0.0
    %185 = vmatpush1.msra.mxu0 0.0
    %186 = vmatprep.subr.mxu0 0.0
    %187 = vmatpush1.msra.mxu0 0.0
    %188 = vmatprep.subr.mxu0 0.0
    %189 = vmatpush1.msra.mxu0 0.0
    %190 = vmatprep.subr.mxu0 0.0
    %191 = vmatpush1.msra.mxu0 0.0
    %192 = vmatprep.subr.mxu0 0.0
    %193 = vmatpush1.msra.mxu0 0.0
    %194 = vmatprep.subr.mxu0 0.0
    %195 = vmatpush1.msra.mxu0 0.0
    %196 = vmatprep.subr.mxu0 0.0
    %197 = vmatpush1.msra.mxu0 0.0
    %198 = vmatprep.subr.mxu0 0.0
    %199 = vmatpush1.msra.mxu0 0.0
    %200 = vmatprep.subr.mxu0 0.0
    %201 = vmatpush1.msra.mxu0 0.0
    %202 = vmatprep.subr.mxu0 0.0
    %203 = vmatpush1.msra.mxu0 0.0
    %204 = vmatprep.subr.mxu0 0.0
    %205 = vmatpush1.msra.mxu0 0.0
    %206 = vmatprep.subr.mxu0 0.0
    %207 = vmatpush1.msra.mxu0 0.0
    %208 = vmatprep.subr.mxu0 0.0
    %209 = vmatpush1.msra.mxu0 0.0
    %210 = vmatprep.subr.mxu0 0.0
    %211 = vmatpush1.msra.mxu0 0.0
    %212 = vmatprep.subr.mxu0 0.0
    %213 = vmatpush1.msra.mxu0 0.0
    %214 = vmatprep.subr.mxu0 0.0
    %215 = vmatpush1.msra.mxu0 0.0
    %216 = vmatprep.subr.mxu0 0.0
    %217 = vmatpush1.msra.mxu0 0.0
    %218 = vmatprep.subr.mxu0 0.0
    %219 = vmatpush1.msra.mxu0 0.0
    %220 = vmatprep.subr.mxu0 0.0
    %221 = vmatpush1.msra.mxu0 0.0
    %222 = vmatprep.subr.mxu0 0.0
    %223 = vmatpush1.msra.mxu0 0.0
    %224 = vmatprep.subr.mxu0 0.0
    %225 = vmatpush1.msra.mxu0 0.0
    %226 = vmatprep.subr.mxu0 0.0
    %227 = vmatpush1.msra.mxu0 0.0
    %228 = vmatprep.subr.mxu0 0.0
    %229 = vmatpush1.msra.mxu0 0.0
    %230 = vmatprep.subr.mxu0 0.0
    %231 = vmatpush1.msra.mxu0 0.0
    %232 = vmatprep.subr.mxu0 0.0
    %233 = vmatpush1.msra.mxu0 0.0
    %234 = vmatprep.subr.mxu0 0.0
    %235 = vmatpush1.msra.mxu0 0.0
    %236 = vmatprep.subr.mxu0 0.0
    %237 = vmatpush1.msra.mxu0 0.0
    %238 = vmatprep.subr.mxu0 0.0
    %239 = vmatpush1.msra.mxu0 0.0
    %240 = vmatprep.subr.mxu0 0.0
    %241 = vmatpush1.msra.mxu0 0.0
    %242 = vmatprep.subr.mxu0 0.0
    %243 = vmatpush1.msra.mxu0 0.0
    %244 = vmatprep.subr.mxu0 0.0
    %245 = vmatpush1.msra.mxu0 0.0
    %246 = vmatprep.mubr.f32.mxu0 0.0
    %247 = vmatmul.mubr.f32.gmra.mrb[0].mxu0 %v176
    %v248 = vpop.f32.mrb[0].mxu0
    %v249 = vadd.f32 0.0, %v248
    %v250 = vpop.f32.mrb[0].mxu0
    %251 = vdwg.mxu0
    %v252 = vxor.u32 %v249, 2147483648
    %v253 = vmul.f32 %v252, 1.442695
    %v254 = vpow.pop %v253
    %v255 = vadd.f32 %v254, 1.0
    %v256 = vrcp.pop %v255
    %v257 = vmul.f32 1.0, %v256
    %vm258 = vcmask 25600
    %259 = vst.msk [vmem:[#allocation5] sm:$0x3] %vm258, %v257
    // Predicated region
    $region18: #{tpu_custom_call.1} parent=1 // pred_check
      _
    $region19: #{tpu_custom_call.1} parent=1 // pred_check_branch
      %261 = sbr.rel (0) target = $region21
    $region20: #{tpu_custom_call.1} parent=1 // pred_region
      %s263 = ssub.s32 32, 32
      %264 = vsyncadd [#allocation4], %s263
      %s266 = sshll.u32 [#allocation5], 4
      %s267 = int_to_ptr.vmem [resolvable:$true] %s266
      %269 = dma.vmem_to_hbm [thread:$0]  %s267, 32, %s3, [#allocation4]
    $region21: #{tpu_custom_call.1} parent=1 // pred_fallthru
      _
    // Predicated region
    $region22: #{tpu_custom_call.1} parent=1 // pred_check
      _
    $region23: #{tpu_custom_call.1} parent=1 // pred_check_branch
      %271 = sbr.rel (0) target = $region25
    $region24: #{tpu_custom_call.1} parent=1 // pred_region
      %272 = dma.done [#allocation4], 32
    $region25: #{tpu_custom_call.1} parent=1 // pred_fallthru
      _
    %273 = vsyncpa [#allocation3], 1
    %274 = vsyncpa [#allocation4], 1

</llo_original>
